<compile_context>
chip_gen: v6e
topology: v6e:2x2x1
jax: 0.10.0
libtpu: 0.0.40
codegen_flags: <defaults>
</compile_context>

<pallas_src>
import numpy as np
import jax
import jax.numpy as jnp
from jax import lax
from jax.experimental import pallas as pl
from jax.experimental.pallas import tpu as pltpu

_MIB = 1024 * 1024
_NUM_CORES = 2          # leading "parallel" axis of the reduce grid (megacore)
_MAX_BLOCK_ROWS = 2048  # bounds the unrolled per-tile fold to <= 256 strips


def _cdiv(a, b):
    return -(-a // b)


def _round_up(a, m):
    return ((a + m - 1) // m) * m


def _vmem_capacity_bytes():
    try:
        info = pltpu.get_tpu_info()
        cap = getattr(info, "vmem_capacity_bytes", None)
        if cap:
            return int(cap)
    except Exception:
        pass
    return 64 * _MIB


_BUDGET = None


def _budget():
    """(per-tile byte target, vmem_limit_bytes) chosen per TPU generation."""
    global _BUDGET
    if _BUDGET is None:
        cap = _vmem_capacity_bytes()
        if cap >= 100 * _MIB:            # v5e / v6e: 128 MiB physical VMEM
            _BUDGET = (8 * _MIB, 96 * _MIB)
        else:                            # v7x-class: 64 MiB per TensorCore
            _BUDGET = (4 * _MIB, 40 * _MIB)
    return _BUDGET


# ------------------------------ kernels ------------------------------------


def _make_elementwise_kernel(weighted, out_dtype):
    """'none' reduction: pure streaming elementwise kernel."""
    if weighted:
        def kernel(x_ref, t_ref, w_ref, o_ref):
            x = x_ref[...].astype(out_dtype)
            t = t_ref[...].astype(out_dtype)
            w = w_ref[...].astype(out_dtype)
            o_ref[...] = jnp.abs(x - t) * w
        return kernel

    def kernel(x_ref, t_ref, o_ref):
        x = x_ref[...].astype(out_dtype)
        t = t_ref[...].astype(out_dtype)
        o_ref[...] = jnp.abs(x - t)
    return kernel


def _make_reduce_kernel(weighted, *, rows, block_rows, lanes, blocks_per_core,
                        needs_mask):
    """'mean'/'sum' reduction kernel.

    Grid is (cores, blocks_per_core).  Each grid step streams one
    (block_rows, lanes) tile per operand, folds it strip-by-strip (8 rows at a
    time, pure VPU adds on vreg-resident partials) and adds the result into a
    small (8, lanes) f32 accumulator.  The single cross-lane reduce + partial
    store happens only in the per-core epilogue.
    """
    nsub = block_rows // 8

    def strip_valid(c, i, k):
        # absolute row index of every element of strip k, compared against the
        # real row count (masks the ragged last block and any clamped
        # duplicate block on the second core).
        row0 = (c * blocks_per_core + i) * block_rows + 8 * k
        rid = row0 + lax.broadcasted_iota(jnp.int32, (8, lanes), 0)
        return rid < rows

    if weighted:
        def kernel(x_ref, t_ref, w_ref, num_ref, den_ref, acc_num, acc_den):
            i = pl.program_id(1)

            @pl.when(i == 0)
            def _init():
                acc_num[...] = jnp.zeros_like(acc_num)
                acc_den[...] = jnp.zeros_like(acc_den)

            c = pl.program_id(0)
            num_l = jnp.zeros((8, lanes), jnp.float32)
            den_l = jnp.zeros((8, lanes), jnp.float32)
            for k in range(nsub):
                sl = slice(8 * k, 8 * (k + 1))
                xs = x_ref[sl, :].astype(jnp.float32)
                ts = t_ref[sl, :].astype(jnp.float32)
                ws = w_ref[sl, :].astype(jnp.float32)
                p = jnp.abs(xs - ts) * ws
                if needs_mask:
                    valid = strip_valid(c, i, k)
                    p = jnp.where(valid, p, 0.0)
                    ws = jnp.where(valid, ws, 0.0)
                num_l = num_l + p
                den_l = den_l + ws
            acc_num[...] += num_l
            acc_den[...] += den_l

            @pl.when(i == pl.num_programs(1) - 1)
            def _fin():                      # one-time XLU epilogue per core
                num_ref[...] = jnp.full(num_ref.shape,
                                        jnp.sum(acc_num[...]), jnp.float32)
                den_ref[...] = jnp.full(den_ref.shape,
                                        jnp.sum(acc_den[...]), jnp.float32)
        return kernel

    def kernel(x_ref, t_ref, num_ref, acc_num):
        i = pl.program_id(1)

        @pl.when(i == 0)
        def _init():
            acc_num[...] = jnp.zeros_like(acc_num)

        c = pl.program_id(0)
        num_l = jnp.zeros((8, lanes), jnp.float32)
        for k in range(nsub):
            sl = slice(8 * k, 8 * (k + 1))
            xs = x_ref[sl, :].astype(jnp.float32)
            ts = t_ref[sl, :].astype(jnp.float32)
            p = jnp.abs(xs - ts)
            if needs_mask:
                p = jnp.where(strip_valid(c, i, k), p, 0.0)
            num_l = num_l + p
        acc_num[...] += num_l

        @pl.when(i == pl.num_programs(1) - 1)
        def _fin():
            num_ref[...] = jnp.full(num_ref.shape,
                                    jnp.sum(acc_num[...]), jnp.float32)
    return kernel


# ------------------------------ wrapper -------------------------------------


def _as_lane_matrices(operands, n):
    """Lane-dense 2D views (rows, lanes) of the flattened operands.

    Fast path (n divisible by 128): pure free reshapes, zero HBM copies.
    Ragged path (n % 128 != 0): one unavoidable pad copy per operand.
    """
    for lanes in (512, 256, 128):
        if n % lanes == 0 and n >= 8 * lanes:
            rows = n // lanes
            return [a.reshape(rows, lanes) for a in operands], rows, lanes, False
    if n % 128 == 0:
        rows = n // 128
        return [a.reshape(rows, 128) for a in operands], rows, 128, False
    # TODO(synk): no zero-copy lane-dense view exists when n % 128 != 0; pad.
    lanes = 128
    rows = _cdiv(n, lanes)
    pad = rows * lanes - n
    outs = []
    for a in operands:
        flat = a.reshape(-1)
        flat = jnp.pad(flat, (0, pad))
        outs.append(flat.reshape(rows, lanes))
    return outs, rows, lanes, True


def weighted_l1_loss(inputs, target, weight=None, reduction="mean", *,
                     max_block_rows=None):
    if reduction not in ("mean", "sum", "none"):
        raise ValueError(f"unsupported reduction: {reduction!r}")

    n = int(np.prod(inputs.shape)) if inputs.shape else 1
    if weight is None:
        out_dtype = jnp.result_type(inputs.dtype, target.dtype)
        operands = (inputs, target)
    else:
        out_dtype = jnp.result_type(inputs.dtype, target.dtype, weight.dtype)
        operands = (inputs, target, weight)

    tile_bytes, vmem_limit = _budget()
    ops2d, rows, lanes, padded = _as_lane_matrices(operands, n)

    # --- row-block / grid selection ----------------------------------------
    cap_rows = _MAX_BLOCK_ROWS if max_block_rows is None else int(max_block_rows)
    cap_rows = max(8, (cap_rows // 8) * 8)
    byte_rows = max(8, (tile_bytes // (lanes * 4)) // 8 * 8)
    bmax = min(cap_rows, byte_rows)

    min_blocks = _cdiv(rows, bmax)
    nb = _round_up(max(min_blocks, 1), _NUM_CORES)       # aim for an even split
    block_rows = _round_up(_cdiv(rows, nb), 8)
    blocks_total = _cdiv(rows, block_rows)

    if blocks_total % _NUM_CORES == 0:
        cores, bpc = _NUM_CORES, blocks_total // _NUM_CORES
    elif blocks_total >= 8 * _NUM_CORES:
        # odd but large: accept one clamped+masked duplicate block (<= 1/16
        # extra traffic on 1-TC chips, enables the 2x split on v7x).
        cores, bpc = _NUM_CORES, _cdiv(blocks_total, _NUM_CORES)
    else:
        cores, bpc = 1, blocks_total

    needs_mask = (rows % block_rows != 0) or (cores * bpc != blocks_total)

    # --- 'none' reduction: streaming elementwise ----------------------------
    if reduction == "none":
        kernel = _make_elementwise_kernel(weight is not None, out_dtype)
        tile_spec = pl.BlockSpec((block_rows, lanes), lambda i: (i, 0))
        out2d = pl.pallas_call(
            kernel,
            out_shape=jax.ShapeDtypeStruct((rows, lanes), out_dtype),
            grid=(blocks_total,),
            in_specs=[tile_spec] * len(ops2d),
            out_specs=tile_spec,
            compiler_params=pltpu.CompilerParams(
                dimension_semantics=("parallel",),
                vmem_limit_bytes=vmem_limit,
            ),
        )(*ops2d)
        if padded:
            return out2d.reshape(-1)[:n].reshape(inputs.shape)
        return out2d.reshape(inputs.shape)

    # --- 'mean' / 'sum': two-core partial reduction --------------------------
    weighted = weight is not None
    kernel = _make_reduce_kernel(
        weighted, rows=rows, block_rows=block_rows, lanes=lanes,
        blocks_per_core=bpc, needs_mask=needs_mask)

    def tile_map(c, i):
        # clamp so a duplicate trailing block never DMAs out of bounds; its
        # contribution is masked to zero inside the kernel.
        return (jnp.minimum(c * bpc + i, blocks_total - 1), 0)

    tile_spec = pl.BlockSpec((block_rows, lanes), tile_map)
    part_spec = pl.BlockSpec((1, 8, 128), lambda c, i: (c, 0, 0))
    part_shape = jax.ShapeDtypeStruct((cores, 8, 128), jnp.float32)
    cparams = pltpu.CompilerParams(
        dimension_semantics=("parallel", "arbitrary"),
        vmem_limit_bytes=vmem_limit,
    )

    if weighted:
        num_p, den_p = pl.pallas_call(
            kernel,
            out_shape=(part_shape, part_shape),
            grid=(cores, bpc),
            in_specs=[tile_spec, tile_spec, tile_spec],
            out_specs=(part_spec, part_spec),
            scratch_shapes=[pltpu.VMEM((8, lanes), jnp.float32),
                            pltpu.VMEM((8, lanes), jnp.float32)],
            compiler_params=cparams,
        )(*ops2d)
        num = jnp.sum(num_p[:, 0, 0])
        den = jnp.sum(den_p[:, 0, 0])
    else:
        num_p = pl.pallas_call(
            kernel,
            out_shape=part_shape,
            grid=(cores, bpc),
            in_specs=[tile_spec, tile_spec],
            out_specs=part_spec,
            scratch_shapes=[pltpu.VMEM((8, lanes), jnp.float32)],
            compiler_params=cparams,
        )(*ops2d)
        num = jnp.sum(num_p[:, 0, 0])
        den = jnp.float32(n)

    if reduction == "mean":
        return (num / den).astype(out_dtype)
    return num.astype(out_dtype)  # 'sum'


# ------------------------------ test ----------------------------------------


def _ref_loss(x, t, w, reduction):
    if w is None:
        r = jnp.abs(x - t)
        if reduction == "mean":
            return jnp.mean(r)
        if reduction == "sum":
            return jnp.sum(r)
        return r
    r = jnp.abs(x - t) * w
    if reduction == "mean":
        return jnp.sum(r) / jnp.sum(w)
    if reduction == "sum":
        return jnp.sum(r)
    return r


if __name__ == "__main__":
    key = jax.random.PRNGKey(0)

    cases = [
        # (shape, weighted, reduction, extra kwargs)
        ((2, 4, 16, 16), True, "mean", {}),
        ((2, 4, 16, 16), True, "sum", {}),
        ((2, 4, 16, 16), True, "none", {}),
        ((2, 4, 16, 16), False, "mean", {}),
        ((2, 4, 16, 16), False, "sum", {}),
        ((2, 4, 16, 16), False, "none", {}),
        # multi-step accumulation + ragged last row-block + 2-core split
        ((40, 320), True, "mean", {"max_block_rows": 8}),
        ((40, 320), False, "sum", {"max_block_rows": 8}),
        ((40, 320), True, "none", {"max_block_rows": 8}),
        # n not a multiple of 128 -> padded fallback path
        ((3, 1000), True, "mean", {}),
        ((3, 1000), True, "none", {}),
    ]

    for idx, (shape, weighted, reduction, kw) in enumerate(cases):
        ka, kb, kc = jax.random.split(jax.random.fold_in(key, idx), 3)
        x = jax.random.normal(ka, shape, dtype=jnp.float32)
        t = jax.random.normal(kb, shape, dtype=jnp.float32)
        w = jax.random.uniform(kc, shape, dtype=jnp.float32) if weighted else None

        got = jax.block_until_ready(
            weighted_l1_loss(x, t, w, reduction=reduction, **kw))
        want = _ref_loss(x, t, w, reduction)
        np.testing.assert_allclose(
            np.asarray(got), np.asarray(want), rtol=1e-5, atol=1e-5,
            err_msg=f"case {idx}: shape={shape} weighted={weighted} "
                    f"reduction={reduction}")

    print("KERNEL_OK")
</pallas_src>

<mosaic_0001>
module attributes {stable_mosaic.version = 11 : i64} {
  func.func @kernel(%arg0: i32, %arg1: i32, %arg2: memref<8x256xf32, #tpu.memory_space<vmem>>, %arg3: memref<8x256xf32, #tpu.memory_space<vmem>>, %arg4: memref<8x256xf32, #tpu.memory_space<vmem>>, %arg5: memref<1x8x128xf32, #tpu.memory_space<vmem>>, %arg6: memref<1x8x128xf32, #tpu.memory_space<vmem>>, %arg7: memref<8x256xf32, #tpu.memory_space<vmem>>, %arg8: memref<8x256xf32, #tpu.memory_space<vmem>>) attributes {dimension_semantics = [#tpu.dimension_semantics<parallel>, #tpu.dimension_semantics<arbitrary>], iteration_bounds = array<i64: 1, 1>, scalar_prefetch = 0 : i64, scratch_operands = 2 : i64, tpu.core_type = #tpu.core_type<tc>, window_params = [{transform_indices = @transform_0, window_bounds = array<i64: 8, 256>}, {transform_indices = @transform_1, window_bounds = array<i64: 8, 256>}, {transform_indices = @transform_2, window_bounds = array<i64: 8, 256>}, {transform_indices = @transform_3, window_bounds = array<i64: 1, 8, 128>}, {transform_indices = @transform_4, window_bounds = array<i64: 1, 8, 128>}]} {
    %c0_i32 = arith.constant 0 : i32
    %0 = arith.cmpi eq, %arg1, %c0_i32 : i32
    %1 = arith.extui %0 : i1 to i32
    %c0_i32_0 = arith.constant 0 : i32
    %2 = arith.cmpi ne, %1, %c0_i32_0 : i32
    scf.if %2 {
      %cst_17 = arith.constant 0.000000e+00 : f32
      %22 = vector.broadcast %cst_17 : f32 to vector<8x256xf32>
      %c0_18 = arith.constant 0 : index
      %c0_19 = arith.constant 0 : index
      %23 = vector.load %arg7[%c0_18, %c0_19] : memref<8x256xf32, #tpu.memory_space<vmem>>, vector<8x256xf32>
      tpu.vector_store %arg7[%c0_18, %c0_19], %22 {strides = array<i32>} : memref<8x256xf32, #tpu.memory_space<vmem>>, vector<8x256xf32>,
      %cst_20 = arith.constant 0.000000e+00 : f32
      %24 = vector.broadcast %cst_20 : f32 to vector<8x256xf32>
      %c0_21 = arith.constant 0 : index
      %c0_22 = arith.constant 0 : index
      %25 = vector.load %arg8[%c0_21, %c0_22] : memref<8x256xf32, #tpu.memory_space<vmem>>, vector<8x256xf32>
      tpu.vector_store %arg8[%c0_21, %c0_22], %24 {strides = array<i32>} : memref<8x256xf32, #tpu.memory_space<vmem>>, vector<8x256xf32>,
    } else {
    }
    %cst = arith.constant 0.000000e+00 : f32
    %3 = vector.broadcast %cst : f32 to vector<8x256xf32>
    %cst_1 = arith.constant 0.000000e+00 : f32
    %4 = vector.broadcast %cst_1 : f32 to vector<8x256xf32>
    %c0 = arith.constant 0 : index
    %c0_2 = arith.constant 0 : index
    %5 = vector.load %arg2[%c0, %c0_2] : memref<8x256xf32, #tpu.memory_space<vmem>>, vector<8x256xf32>
    %c0_3 = arith.constant 0 : index
    %c0_4 = arith.constant 0 : index
    %6 = vector.load %arg3[%c0_3, %c0_4] : memref<8x256xf32, #tpu.memory_space<vmem>>, vector<8x256xf32>
    %c0_5 = arith.constant 0 : index
    %c0_6 = arith.constant 0 : index
    %7 = vector.load %arg4[%c0_5, %c0_6] : memref<8x256xf32, #tpu.memory_space<vmem>>, vector<8x256xf32>
    %8 = arith.subf %5, %6 : vector<8x256xf32>
    %9 = math.absf %8 : vector<8x256xf32>
    %10 = arith.mulf %9, %7 : vector<8x256xf32>
    %11 = arith.addf %3, %10 : vector<8x256xf32>
    %12 = arith.addf %4, %7 : vector<8x256xf32>
    %c0_7 = arith.constant 0 : index
    %c0_8 = arith.constant 0 : index
    %13 = vector.load %arg7[%c0_7, %c0_8] : memref<8x256xf32, #tpu.memory_space<vmem>>, vector<8x256xf32>
    %14 = arith.addf %13, %11 : vector<8x256xf32>
    %c0_9 = arith.constant 0 : index
    %c0_10 = arith.constant 0 : index
    %15 = vector.load %arg7[%c0_9, %c0_10] : memref<8x256xf32, #tpu.memory_space<vmem>>, vector<8x256xf32>
    tpu.vector_store %arg7[%c0_9, %c0_10], %14 {strides = array<i32>} : memref<8x256xf32, #tpu.memory_space<vmem>>, vector<8x256xf32>,
    %c0_11 = arith.constant 0 : index
    %c0_12 = arith.constant 0 : index
    %16 = vector.load %arg8[%c0_11, %c0_12] : memref<8x256xf32, #tpu.memory_space<vmem>>, vector<8x256xf32>
    %17 = arith.addf %16, %12 : vector<8x256xf32>
    %c0_13 = arith.constant 0 : index
    %c0_14 = arith.constant 0 : index
    %18 = vector.load %arg8[%c0_13, %c0_14] : memref<8x256xf32, #tpu.memory_space<vmem>>, vector<8x256xf32>
    tpu.vector_store %arg8[%c0_13, %c0_14], %17 {strides = array<i32>} : memref<8x256xf32, #tpu.memory_space<vmem>>, vector<8x256xf32>,
    %c0_i32_15 = arith.constant 0 : i32
    %19 = arith.cmpi eq, %arg1, %c0_i32_15 : i32
    %20 = arith.extui %19 : i1 to i32
    %c0_i32_16 = arith.constant 0 : i32
    %21 = arith.cmpi ne, %20, %c0_i32_16 : i32
    scf.if %21 {
      %c0_17 = arith.constant 0 : index
      %c0_18 = arith.constant 0 : index
      %22 = vector.load %arg7[%c0_17, %c0_18] : memref<8x256xf32, #tpu.memory_space<vmem>>, vector<8x256xf32>
      %23 = vector.shape_cast %22 : vector<8x256xf32> to vector<1x8x256xf32>
      %cst_19 = arith.constant dense<0.000000e+00> : vector<1xf32>
      %24 = vector.multi_reduction <add>, %23, %cst_19 [1, 2] : vector<1x8x256xf32> to vector<1xf32>
      %25 = vector.shape_cast %24 : vector<1xf32> to vector<1x1x1xf32>
      %26 = vector.extract %25[0, 0, 0] : f32 from vector<1x1x1xf32>
      %27 = vector.broadcast %26 : f32 to vector<1x8x128xf32>
      %c0_20 = arith.constant 0 : index
      %c0_21 = arith.constant 0 : index
      %c0_22 = arith.constant 0 : index
      %28 = vector.load %arg5[%c0_20, %c0_21, %c0_22] : memref<1x8x128xf32, #tpu.memory_space<vmem>>, vector<1x8x128xf32>
      tpu.vector_store %arg5[%c0_20, %c0_21, %c0_22], %27 {strides = array<i32>} : memref<1x8x128xf32, #tpu.memory_space<vmem>>, vector<1x8x128xf32>,
      %c0_23 = arith.constant 0 : index
      %c0_24 = arith.constant 0 : index
      %29 = vector.load %arg8[%c0_23, %c0_24] : memref<8x256xf32, #tpu.memory_space<vmem>>, vector<8x256xf32>
      %30 = vector.shape_cast %29 : vector<8x256xf32> to vector<1x8x256xf32>
      %cst_25 = arith.constant dense<0.000000e+00> : vector<1xf32>
      %31 = vector.multi_reduction <add>, %30, %cst_25 [1, 2] : vector<1x8x256xf32> to vector<1xf32>
      %32 = vector.shape_cast %31 : vector<1xf32> to vector<1x1x1xf32>
      %33 = vector.extract %32[0, 0, 0] : f32 from vector<1x1x1xf32>
      %34 = vector.broadcast %33 : f32 to vector<1x8x128xf32>
      %c0_26 = arith.constant 0 : index
      %c0_27 = arith.constant 0 : index
      %c0_28 = arith.constant 0 : index
      %35 = vector.load %arg6[%c0_26, %c0_27, %c0_28] : memref<1x8x128xf32, #tpu.memory_space<vmem>>, vector<1x8x128xf32>
      tpu.vector_store %arg6[%c0_26, %c0_27, %c0_28], %34 {strides = array<i32>} : memref<1x8x128xf32, #tpu.memory_space<vmem>>, vector<1x8x128xf32>,
    } else {
    }
    return
  }
  func.func @transform_0(%arg0: i32, %arg1: i32) -> (i32, i32) {
    %c1_i32 = arith.constant 1 : i32
    %0 = arith.muli %arg0, %c1_i32 : i32
    %1 = arith.addi %0, %arg1 : i32
    %c0_i32 = arith.constant 0 : i32
    %2 = arith.minsi %1, %c0_i32 : i32
    %c0_i32_0 = arith.constant 0 : i32
    %c0_i32_1 = arith.constant 0 : i32
    return %2, %c0_i32_0 : i32, i32
  }
  func.func @transform_1(%arg0: i32, %arg1: i32) -> (i32, i32) {
    %c1_i32 = arith.constant 1 : i32
    %0 = arith.muli %arg0, %c1_i32 : i32
    %1 = arith.addi %0, %arg1 : i32
    %c0_i32 = arith.constant 0 : i32
    %2 = arith.minsi %1, %c0_i32 : i32
    %c0_i32_0 = arith.constant 0 : i32
    %c0_i32_1 = arith.constant 0 : i32
    return %2, %c0_i32_0 : i32, i32
  }
  func.func @transform_2(%arg0: i32, %arg1: i32) -> (i32, i32) {
    %c1_i32 = arith.constant 1 : i32
    %0 = arith.muli %arg0, %c1_i32 : i32
    %1 = arith.addi %0, %arg1 : i32
    %c0_i32 = arith.constant 0 : i32
    %2 = arith.minsi %1, %c0_i32 : i32
    %c0_i32_0 = arith.constant 0 : i32
    %c0_i32_1 = arith.constant 0 : i32
    return %2, %c0_i32_0 : i32, i32
  }
  func.func @transform_3(%arg0: i32, %arg1: i32) -> (i32, i32, i32) {
    %c0_i32 = arith.constant 0 : i32
    %c0_i32_0 = arith.constant 0 : i32
    %c0_i32_1 = arith.constant 0 : i32
    return %arg0, %c0_i32, %c0_i32_0 : i32, i32, i32
  }
  func.func @transform_4(%arg0: i32, %arg1: i32) -> (i32, i32, i32) {
    %c0_i32 = arith.constant 0 : i32
    %c0_i32_0 = arith.constant 0 : i32
    %c0_i32_1 = arith.constant 0 : i32
    return %arg0, %c0_i32, %c0_i32_0 : i32, i32, i32
  }
}

</mosaic_0001>

<llo_original>
// kernel: tpu_custom_call.1
$region0: #{tpu_custom_call.1}
  #allocation0 [shape = 'u32[]', space=smem, size = 0x4, offset = 0x4, fixed_abs, tag = 'smem constant byte address 0x4 - core index']
  #allocation1 [shape = 'u32[144,128]{1,0:T(1,128)}', space=vmem, size = 0x12000, scoped, tag = 'internal scratch']
  #allocation2 [shape = 'f32[8,256]{1,0:T(8,128)}', space=vmem, size = 0x2000, scoped, tag = 'scratch operand']
  #allocation3 [shape = 'f32[8,256]{1,0:T(8,128)}', space=vmem, size = 0x2000, scoped, tag = 'scratch operand']
  %s0 = inlined_call_operand.hbm [shape: f32[8,256], index: 0, kind: input, shape index: {}]
  %s1 = inlined_call_operand.hbm [shape: f32[8,256], index: 1, kind: input, shape index: {}]
  %s2 = inlined_call_operand.hbm [shape: f32[8,256], index: 2, kind: input, shape index: {}]
  %s3 = inlined_call_operand.hbm [shape: f32[1,8,128], index: 3, kind: output, shape index: {0}]
  %s4 = inlined_call_operand.hbm [shape: f32[1,8,128], index: 4, kind: output, shape index: {1}]
  %5 = xla_tuple %s3, %s4
  %s6 = sld [smem:[#allocation0]]
  $region50: #{tpu_custom_call.1} parent=0
    _
  %s8 = ssub.s32 1, %s6
  %s9 = scalar_select 0, %s8, %s6
  $region1: #{tpu_custom_call.1} parent=0
    #allocation4 [shape = 'u8[8192]{0}', space=vmem, size = 0x2000, scoped, tag = 'input window, operand 0, single buffered']
    #allocation5 [shape = 's32[1]{0}', space=sflag, size = 0x4, scoped, tag = 'scoped memory for tpu_custom_call.1']
    #allocation6 [shape = 's32[1]{0}', space=sflag, size = 0x4, scoped, tag = 'scoped memory for tpu_custom_call.1']
    #allocation7 [shape = 'u8[8192]{0}', space=vmem, size = 0x2000, scoped, tag = 'input window, operand 1, single buffered']
    #allocation8 [shape = 's32[1]{0}', space=sflag, size = 0x4, scoped, tag = 'scoped memory for tpu_custom_call.1']
    #allocation9 [shape = 'u8[8192]{0}', space=vmem, size = 0x2000, scoped, tag = 'input window, operand 2, single buffered']
    #allocation10 [shape = 'u8[4096]{0}', space=vmem, size = 0x1000, scoped, tag = 'output window, operand 0, single buffered']
    #allocation11 [shape = 'u8[4096]{0}', space=vmem, size = 0x1000, scoped, tag = 'output window, operand 1, single buffered']
    #allocation12 [shape = 's32[1]{0}', space=sflag, size = 0x4, scoped, tag = 'scoped memory for tpu_custom_call.1']
    %10 = vsyncpa [#allocation5], 0
    %11 = vsyncpa [#allocation8], 0
    %12 = vsyncpa [#allocation6], 0
    %13 = vsyncpa [#allocation12], 0
    // Predicated region
    $region2: #{tpu_custom_call.1} parent=1 // pred_check
      _
    $region3: #{tpu_custom_call.1} parent=1 // pred_check_branch
      %15 = sbr.rel (0) target = $region5
    $region4: #{tpu_custom_call.1} parent=1 // pred_region
      %s16 = sadd.s32 0, 0
      %p17 = scmp.lt.s32.totalorder %s16, 0
      %s18 = scalar_select %p17, %s16, 0
      %s20 = ssub.s32 256, 256
      %21 = vsyncadd [#allocation5], %s20
      %s22 = smul.addr %s18, 2
      %s23 = smul.addr %s22, 128
      %s24 = scalar_lea.hbm %s0, %s23
      %s26 = sshll.u32 [#allocation4], 4
      %s27 = int_to_ptr.vmem [resolvable:$true] %s26
      %29 = dma.hbm_to_vmem [thread:$0]  %s24, 256, %s27, [#allocation5]
    $region5: #{tpu_custom_call.1} parent=1 // pred_fallthru
      _
    // Predicated region
    $region6: #{tpu_custom_call.1} parent=1 // pred_check
      _
    $region7: #{tpu_custom_call.1} parent=1 // pred_check_branch
      %31 = sbr.rel (0) target = $region9
    $region8: #{tpu_custom_call.1} parent=1 // pred_region
      %s32 = sadd.s32 0, 0
      %p33 = scmp.lt.s32.totalorder %s32, 0
      %s34 = scalar_select %p33, %s32, 0
      %s36 = ssub.s32 256, 256
      %37 = vsyncadd [#allocation8], %s36
      %s38 = smul.addr %s34, 2
      %s39 = smul.addr %s38, 128
      %s40 = scalar_lea.hbm %s1, %s39
      %s42 = sshll.u32 [#allocation7], 4
      %s43 = int_to_ptr.vmem [resolvable:$true] %s42
      %45 = dma.hbm_to_vmem [thread:$0]  %s40, 256, %s43, [#allocation8]
    $region9: #{tpu_custom_call.1} parent=1 // pred_fallthru
      _
    // Predicated region
    $region10: #{tpu_custom_call.1} parent=1 // pred_check
      _
    $region11: #{tpu_custom_call.1} parent=1 // pred_check_branch
      %47 = sbr.rel (0) target = $region13
    $region12: #{tpu_custom_call.1} parent=1 // pred_region
      %s48 = sadd.s32 0, 0
      %p49 = scmp.lt.s32.totalorder %s48, 0
      %s50 = scalar_select %p49, %s48, 0
      %s52 = ssub.s32 256, 256
      %53 = vsyncadd [#allocation8], %s52
      %s54 = smul.addr %s50, 2
      %s55 = smul.addr %s54, 128
      %s56 = scalar_lea.hbm %s2, %s55
      %s58 = sshll.u32 [#allocation9], 4
      %s59 = int_to_ptr.vmem [resolvable:$true] %s58
      %61 = dma.hbm_to_vmem [thread:$0]  %s56, 256, %s59, [#allocation8]
    $region13: #{tpu_custom_call.1} parent=1 // pred_fallthru
      _
    // Predicated region
    $region14: #{tpu_custom_call.1} parent=1 // pred_check
      _
    $region15: #{tpu_custom_call.1} parent=1 // pred_check_branch
      %63 = sbr.rel (0) target = $region17
    $region16: #{tpu_custom_call.1} parent=1 // pred_region
      %64 = dma.done [#allocation5], 256
    $region17: #{tpu_custom_call.1} parent=1 // pred_fallthru
      _
    // Predicated region
    $region18: #{tpu_custom_call.1} parent=1 // pred_check
      _
    $region19: #{tpu_custom_call.1} parent=1 // pred_check_branch
      %66 = sbr.rel (0) target = $region21
    $region20: #{tpu_custom_call.1} parent=1 // pred_region
      %67 = dma.done [#allocation8], 256
    $region21: #{tpu_custom_call.1} parent=1 // pred_fallthru
      _
    // Predicated region
    $region22: #{tpu_custom_call.1} parent=1 // pred_check
      _
    $region23: #{tpu_custom_call.1} parent=1 // pred_check_branch
      %69 = sbr.rel (0) target = $region25
    $region24: #{tpu_custom_call.1} parent=1 // pred_region
      %70 = dma.done [#allocation8], 256
    $region25: #{tpu_custom_call.1} parent=1 // pred_fallthru
      _
    %s71 = sadd.s32 0, 0
    %p72 = scmp.lt.s32.totalorder %s71, 0
    %s73 = scalar_select %p72, %s71, 0
    %s74 = sadd.s32 0, 0
    %p75 = scmp.lt.s32.totalorder %s74, 0
    %s76 = scalar_select %p75, %s74, 0
    %s77 = sadd.s32 0, 0
    %p78 = scmp.lt.s32.totalorder %s77, 0
    %s79 = scalar_select %p78, %s77, 0
    %p80 = scmp.eq.s32.totalorder 0, 0
    // Predicated region
    $region26: #{tpu_custom_call.1} parent=1 // pred_check
      %p81 = pneg %p80
    $region27: #{tpu_custom_call.1} parent=1 // pred_check_branch
      %83 = sbr.rel (%p81) target = $region29
    $region28: #{tpu_custom_call.1} parent=1 // pred_region
      %84 = vst [vmem:[#allocation2] sm:$0xff] 0.0
      %85 = vst [vmem:[#allocation2 + $0x8] sm:$0xff] 0.0
      %86 = vst [vmem:[#allocation3] sm:$0xff] 0.0
      %87 = vst [vmem:[#allocation3 + $0x8] sm:$0xff] 0.0
    $region29: #{tpu_custom_call.1} parent=1 // pred_fallthru
      _
    %v88 = vld [vmem:[#allocation4] sm:$0xff]
    %v89 = vld [vmem:[#allocation4 + $0x8] sm:$0xff]
    %v90 = vld [vmem:[#allocation7] sm:$0xff]
    %v91 = vld [vmem:[#allocation7 + $0x8] sm:$0xff]
    %v92 = vld [vmem:[#allocation9] sm:$0xff]
    %v93 = vld [vmem:[#allocation9 + $0x8] sm:$0xff]
    %v94 = vsub.f32 %v88, %v90
    %v95 = vsub.f32 %v89, %v91
    %v96 = vand.u32 2147483647, %v94
    %v97 = vand.u32 2147483647, %v95
    %v98 = vmul.f32 %v96, %v92
    %v99 = vmul.f32 %v97, %v93
    %v100 = vadd.f32 %v98, 0.0
    %v101 = vadd.f32 %v99, 0.0
    %v102 = vadd.f32 %v92, 0.0
    %v103 = vadd.f32 %v93, 0.0
    %v104 = vld [vmem:[#allocation2] sm:$0xff]
    %v105 = vld [vmem:[#allocation2 + $0x8] sm:$0xff]
    %v106 = vadd.f32 %v104, %v100
    %v107 = vadd.f32 %v105, %v101
    %108 = vst [vmem:[#allocation2] sm:$0xff] %v106
    %109 = vst [vmem:[#allocation2 + $0x8] sm:$0xff] %v107
    %v110 = vld [vmem:[#allocation3] sm:$0xff]
    %v111 = vld [vmem:[#allocation3 + $0x8] sm:$0xff]
    %v112 = vadd.f32 %v110, %v102
    %v113 = vadd.f32 %v111, %v103
    %114 = vst [vmem:[#allocation3] sm:$0xff] %v112
    %115 = vst [vmem:[#allocation3 + $0x8] sm:$0xff] %v113
    // Predicated region
    $region30: #{tpu_custom_call.1} parent=1 // pred_check
      %p116 = pneg %p80
    $region31: #{tpu_custom_call.1} parent=1 // pred_check_branch
      %118 = sbr.rel (%p116) target = $region33
    $region32: #{tpu_custom_call.1} parent=1 // pred_region
      %v119 = vld [vmem:[#allocation2] sm:$0xff]
      %v120 = vld [vmem:[#allocation2 + $0x8] sm:$0xff]
      %v121 = vadd.f32 %v119, %v120
      %122 = vadd.xlane.f32.xlu0 %v121
      %v123 = vpop.xlane.xlu0 %122
      %v124 = vrot.slane %v123, 4
      %v125 = vadd.f32 %v123, %v124
      %v126 = vrot.slane %v125, 2
      %v127 = vadd.f32 %v125, %v126
      %v128 = vrot.slane %v127, 1
      %v129 = vadd.f32 %v127, %v128
      %s130 = vtos %v129
      %v131 = vstv %s130
      %132 = vst [vmem:[#allocation10] sm:$0xff] %v131
      %v133 = vld [vmem:[#allocation3] sm:$0xff]
      %v134 = vld [vmem:[#allocation3 + $0x8] sm:$0xff]
      %v135 = vadd.f32 %v133, %v134
      %136 = vadd.xlane.f32.xlu0 %v135
      %v137 = vpop.xlane.xlu0 %136
      %v138 = vrot.slane %v137, 4
      %v139 = vadd.f32 %v137, %v138
      %v140 = vrot.slane %v139, 2
      %v141 = vadd.f32 %v139, %v140
      %v142 = vrot.slane %v141, 1
      %v143 = vadd.f32 %v141, %v142
      %s144 = vtos %v143
      %v145 = vstv %s144
      %146 = vst [vmem:[#allocation11] sm:$0xff] %v145
    $region33: #{tpu_custom_call.1} parent=1 // pred_fallthru
      _
    // Predicated region
    $region34: #{tpu_custom_call.1} parent=1 // pred_check
      _
    $region35: #{tpu_custom_call.1} parent=1 // pred_check_branch
      %148 = sbr.rel (0) target = $region37
    $region36: #{tpu_custom_call.1} parent=1 // pred_region
      %s150 = ssub.s32 128, 128
      %151 = vsyncadd [#allocation6], %s150
      %s153 = sshll.u32 [#allocation10], 4
      %s154 = int_to_ptr.vmem [resolvable:$true] %s153
      %156 = dma.vmem_to_hbm [thread:$0]  %s154, 128, %s3, [#allocation6]
    $region37: #{tpu_custom_call.1} parent=1 // pred_fallthru
      _
    // Predicated region
    $region38: #{tpu_custom_call.1} parent=1 // pred_check
      _
    $region39: #{tpu_custom_call.1} parent=1 // pred_check_branch
      %158 = sbr.rel (0) target = $region41
    $region40: #{tpu_custom_call.1} parent=1 // pred_region
      %s160 = ssub.s32 128, 128
      %161 = vsyncadd [#allocation12], %s160
      %s163 = sshll.u32 [#allocation11], 4
      %s164 = int_to_ptr.vmem [resolvable:$true] %s163
      %166 = dma.vmem_to_hbm [thread:$0]  %s164, 128, %s4, [#allocation12]
    $region41: #{tpu_custom_call.1} parent=1 // pred_fallthru
      _
    // Predicated region
    $region42: #{tpu_custom_call.1} parent=1 // pred_check
      _
    $region43: #{tpu_custom_call.1} parent=1 // pred_check_branch
      %168 = sbr.rel (0) target = $region45
    $region44: #{tpu_custom_call.1} parent=1 // pred_region
      %169 = dma.done [#allocation6], 128
    $region45: #{tpu_custom_call.1} parent=1 // pred_fallthru
      _
    // Predicated region
    $region46: #{tpu_custom_call.1} parent=1 // pred_check
      _
    $region47: #{tpu_custom_call.1} parent=1 // pred_check_branch
      %171 = sbr.rel (0) target = $region49
    $region48: #{tpu_custom_call.1} parent=1 // pred_region
      %172 = dma.done [#allocation12], 128
    $region49: #{tpu_custom_call.1} parent=1 // pred_fallthru
      _
    %173 = vsyncpa [#allocation5], 1
    %174 = vsyncpa [#allocation8], 1
    %175 = vsyncpa [#allocation6], 1
    %176 = vsyncpa [#allocation12], 1

</llo_original>
